<compile_context>
chip_gen: v7x
topology: tpu7x:2x2x1
jax: 0.10.0
libtpu: 0.0.40
codegen_flags: <defaults>
</compile_context>

<pallas_src>
import jax
import jax.numpy as jnp
from jax.experimental import pallas as pl
from jax.experimental.pallas import tpu as pltpu


Q = 0.7
K = 0.5
TRAINSET_SIZE = 128  # synthetic parameter-table size (torch default is 50000)


def _make_kernel(n_total, tile_n, tiles_per_part, q, kq):
    def kernel(logits_ref, side_ref, out_ref, acc_ref):
        # logits_ref : (tile_n, C)  input dtype (f32/bf16) in VMEM
        # side_ref   : (tile_n, 2)  f32: [:, 0] = target logit, [:, 1] = weight[idx]
        # out_ref    : (1, 1)       f32 in SMEM (per-part partial sum)
        # acc_ref    : (tile_n, 1)  f32 VMEM vector accumulator
        p_id = pl.program_id(0)
        i = pl.program_id(1)

        @pl.when(i == 0)
        def _():
            acc_ref[...] = jnp.zeros_like(acc_ref)

        x = logits_ref[...]                                 # (tile_n, C)
        tn = x.shape[0]
        side = side_ref[...]                                # (tile_n, 2) f32
        x_t = side[:, 0:1]                                  # target logit
        w = side[:, 1:2]                                    # weight[indexes]

        # Row-validity mask: partial tail block and replayed/clamped blocks
        # from the part split. Padded rows are kept out of pow and the acc.
        row0 = (p_id * tiles_per_part + i) * tile_n
        row = row0 + jax.lax.broadcasted_iota(jnp.int32, (tn, 1), 0)
        valid = row < n_total

        # Heavy (tile_n, C) pass: max + sub + exp + row-sum only; the target
        # logit was gathered in the wrapper, so no one-hot pass is needed.
        m = jnp.max(x, axis=1, keepdims=True)               # input dtype
        e = jnp.exp((x - m).astype(jnp.float32))            # (tile_n, C) f32
        denom = jnp.sum(e, axis=1, keepdims=True)           # (tile_n, 1) f32
        yg = jnp.exp(x_t - m.astype(jnp.float32)) / denom   # exact per-row softmax

        yg = jnp.where(valid, yg, 1.0)                      # guard before pow
        # folded loss: w * (k**q - yg**q) / q
        loss = w * ((kq - jnp.power(yg, q)) * (1.0 / q))    # (tile_n, 1)
        loss = jnp.where(valid, loss, 0.0)                  # select: no NaN leak

        acc_ref[...] += loss                                # cheap vector add

        @pl.when(i == pl.num_programs(1) - 1)
        def _():
            out_ref[0, 0] = jnp.sum(acc_ref[...])

    return kernel


def truncated_loss(logits, targets, indexes, weight, *, q=Q, k=K,
                   tile_n=None, num_parts=None):
    """Forward of TruncatedLoss.

    logits: (N, C) f32 or bf16, targets/indexes: (N,) int, weight: (T, 1) f32.
    Returns the scalar mean loss.
    """
    n, c = logits.shape
    itemsize = jnp.dtype(logits.dtype).itemsize
    sub = 16 if logits.dtype == jnp.bfloat16 else 8   # sublane packing

    # Generation-aware VMEM budget (v5e/v6e: 128 MiB, v7x: 64 MiB per TC).
    try:
        vmem_cap = int(pltpu.get_tpu_info().vmem_capacity_bytes)
    except Exception:  # older jax / interpret mode: assume 128 MiB class
        vmem_cap = 128 * 1024 * 1024
    vmem_budget = (vmem_cap * 3) // 4                 # leave compiler headroom

    if num_parts is None:
        # Part split only pays on v7x-like chips (2 TCs, ~64 MiB VMEM/core);
        # on single-TC v5e/v6e it is pure pipeline overhead.
        num_parts = 2 if vmem_cap <= 80 * 1024 * 1024 else 1

    n_up = ((n + sub - 1) // sub) * sub
    if tile_n is None:
        # Target a 2-8 MiB logits block so per-step overhead is amortized,
        # while 2 double-buffered logits blocks + side stream fit the budget.
        target_bytes = min(8 * 1024 * 1024, vmem_budget // 4)
        tile_n = max(sub, (target_bytes // (c * itemsize) // sub) * sub)
    else:
        tile_n = max(sub, ((int(tile_n) + sub - 1) // sub) * sub)
    tile_n = min(tile_n, n_up)

    total_blocks = pl.cdiv(n, tile_n)
    num_parts = max(1, min(int(num_parts), total_blocks))
    tiles_per_part = pl.cdiv(total_blocks, num_parts)

    # O(N) glue: gather the target logit and per-sample weight, pack both
    # lane-width-1 side streams into a single (N, 2) f32 input -> one DMA/step.
    x_t = jnp.take_along_axis(
        logits, targets.astype(jnp.int32)[:, None], axis=1).astype(jnp.float32)
    w = weight[indexes].reshape(n, 1).astype(jnp.float32)
    side = jnp.concatenate([x_t, w], axis=1)

    def row_block(p, i):
        # Clamp so replayed tail blocks stay in bounds; their rows are masked.
        blk = jnp.minimum(p * tiles_per_part + i, total_blocks - 1)
        return (blk, 0)

    kernel = _make_kernel(n, tile_n, tiles_per_part, q, k ** q)

    block_bytes = tile_n * c * itemsize + tile_n * 2 * 4
    vmem_limit = int(min(vmem_budget,
                         max(2 * block_bytes + tile_n * 4 + (4 << 20),
                             16 * 1024 * 1024)))

    cost = pl.CostEstimate(
        flops=6 * n * c + 16 * n,
        transcendentals=n * c + 3 * n,
        bytes_accessed=n * c * itemsize + n * 2 * 4 + num_parts * 4,
    )

    partials = pl.pallas_call(
        kernel,
        out_shape=jax.ShapeDtypeStruct((num_parts, 1), jnp.float32),
        grid=(num_parts, tiles_per_part),
        in_specs=[
            pl.BlockSpec((tile_n, c), row_block),
            pl.BlockSpec((tile_n, 2), row_block),
        ],
        out_specs=pl.BlockSpec((1, 1), lambda p, i: (p, 0),
                               memory_space=pltpu.SMEM),
        scratch_shapes=[pltpu.VMEM((tile_n, 1), jnp.float32)],
        compiler_params=pltpu.CompilerParams(
            dimension_semantics=("parallel", "arbitrary"),
            vmem_limit_bytes=vmem_limit,
        ),
        cost_estimate=cost,
    )(logits, side)

    return jnp.sum(partials) / n


def _reference(logits, targets, indexes, weight, q=Q, k=K):
    p = jax.nn.softmax(logits.astype(jnp.float32), axis=1)
    yg = jnp.take_along_axis(p, targets[:, None], axis=1)
    w = weight[indexes]
    loss = (1.0 - yg ** q) / q * w - (1.0 - k ** q) / q * w
    return jnp.mean(loss)


if __name__ == "__main__":
    key = jax.random.PRNGKey(0)
    k1, k2, k3 = jax.random.split(key, 3)

    # N deliberately NOT a multiple of the row tile -> exercises the masking.
    N, C = 20, 32
    logits = jax.random.normal(k1, (N, C), dtype=jnp.float32)
    targets = jax.random.randint(k2, (N,), 0, C, dtype=jnp.int32)
    indexes = jax.random.randint(k3, (N,), 0, TRAINSET_SIZE, dtype=jnp.int32)
    weight = jnp.ones((TRAINSET_SIZE, 1), dtype=jnp.float32)  # torch.ones(T, 1)

    ref = _reference(logits, targets, indexes, weight)

    # 1) Auto-configured path (tile_n / num_parts derived from chip + shape).
    loss_auto = truncated_loss(logits, targets, indexes, weight)
    jax.block_until_ready(loss_auto)
    assert jnp.allclose(loss_auto, ref, atol=1e-5, rtol=1e-5), (loss_auto, ref)

    # 2) Small-tile multi-part path: grid (2, 2) with a clamped/replayed tail
    #    block -> exercises the tiled reduction and the row masking.
    loss_tiled = truncated_loss(logits, targets, indexes, weight,
                                tile_n=8, num_parts=2)
    jax.block_until_ready(loss_tiled)
    assert jnp.allclose(loss_tiled, ref, atol=1e-5, rtol=1e-5), (loss_tiled, ref)

    print("KERNEL_OK")
</pallas_src>

<mosaic_0001>
module attributes {stable_mosaic.version = 11 : i64} {
  func.func @kernel(%arg0: i32, %arg1: i32, %arg2: memref<24x32xf32, #tpu.memory_space<vmem>>, %arg3: memref<24x2xf32, #tpu.memory_space<vmem>>, %arg4: memref<1x1xf32, #tpu.memory_space<smem>>, %arg5: memref<24x1xf32, #tpu.memory_space<vmem>>) attributes {dimension_semantics = [#tpu.dimension_semantics<parallel>, #tpu.dimension_semantics<arbitrary>], iteration_bounds = array<i64: 1, 1>, scalar_prefetch = 0 : i64, scratch_operands = 1 : i64, tpu.core_type = #tpu.core_type<tc>, window_params = [{transform_indices = @transform_0, window_bounds = array<i64: 24, 32>}, {transform_indices = @transform_1, window_bounds = array<i64: 24, 2>}, {transform_indices = @transform_2, window_bounds = array<i64: 1, 1>}]} {
    %c0_i32 = arith.constant 0 : i32
    %0 = arith.cmpi eq, %arg1, %c0_i32 : i32
    %1 = arith.extui %0 : i1 to i32
    %c0_i32_0 = arith.constant 0 : i32
    %2 = arith.cmpi ne, %1, %c0_i32_0 : i32
    scf.if %2 {
      %cst_16 = arith.constant 0.000000e+00 : f32
      %42 = vector.broadcast %cst_16 : f32 to vector<24x1xf32>
      %c0_17 = arith.constant 0 : index
      %c0_18 = arith.constant 0 : index
      %43 = vector.load %arg5[%c0_17, %c0_18] : memref<24x1xf32, #tpu.memory_space<vmem>>, vector<24x1xf32>
      tpu.vector_store %arg5[%c0_17, %c0_18], %42 {strides = array<i32>} : memref<24x1xf32, #tpu.memory_space<vmem>>, vector<24x1xf32>,
    } else {
    }
    %c0 = arith.constant 0 : index
    %c0_1 = arith.constant 0 : index
    %3 = vector.load %arg2[%c0, %c0_1] : memref<24x32xf32, #tpu.memory_space<vmem>>, vector<24x32xf32>
    %c0_2 = arith.constant 0 : index
    %c0_3 = arith.constant 0 : index
    %4 = vector.load %arg3[%c0_2, %c0_3] : memref<24x2xf32, #tpu.memory_space<vmem>>, vector<24x2xf32>
    %5 = vector.extract_strided_slice %4 {offsets = [0, 0], sizes = [24, 1], strides = [1, 1]} : vector<24x2xf32> to vector<24x1xf32>
    %6 = vector.extract_strided_slice %4 {offsets = [0, 1], sizes = [24, 1], strides = [1, 1]} : vector<24x2xf32> to vector<24x1xf32>
    %c1_i32 = arith.constant 1 : i32
    %7 = arith.muli %arg0, %c1_i32 : i32
    %8 = arith.addi %7, %arg1 : i32
    %c24_i32 = arith.constant 24 : i32
    %9 = arith.muli %8, %c24_i32 : i32
    %10 = tpu.iota {dimensions = array<i32: 0>} : vector<24x1xi32>
    %11 = vector.broadcast %9 : i32 to vector<24x1xi32>
    %12 = arith.addi %11, %10 : vector<24x1xi32>
    %c20_i32 = arith.constant 20 : i32
    %13 = vector.broadcast %c20_i32 : i32 to vector<24x1xi32>
    %14 = arith.cmpi slt, %12, %13 : vector<24x1xi32>
    %cst = arith.constant dense<0xFF800000> : vector<24xf32>
    %15 = vector.multi_reduction <maximumf>, %3, %cst [1] : vector<24x32xf32> to vector<24xf32>
    %16 = vector.shape_cast %15 : vector<24xf32> to vector<24x1xf32>
    %17 = vector.broadcast %16 : vector<24x1xf32> to vector<24x32xf32>
    %18 = arith.subf %3, %17 : vector<24x32xf32>
    %19 = math.exp %18 : vector<24x32xf32>
    %cst_4 = arith.constant dense<0.000000e+00> : vector<24xf32>
    %20 = vector.multi_reduction <add>, %19, %cst_4 [1] : vector<24x32xf32> to vector<24xf32>
    %21 = vector.shape_cast %20 : vector<24xf32> to vector<24x1xf32>
    %22 = arith.subf %5, %16 : vector<24x1xf32>
    %23 = math.exp %22 : vector<24x1xf32>
    %24 = arith.divf %23, %21 : vector<24x1xf32>
    %cst_5 = arith.constant 1.000000e+00 : f32
    %25 = vector.broadcast %cst_5 : f32 to vector<24x1xf32>
    %26 = arith.select %14, %24, %25 : vector<24x1xi1>, vector<24x1xf32>
    %cst_6 = arith.constant 0.699999988 : f32
    %27 = vector.broadcast %cst_6 : f32 to vector<24x1xf32>
    %28 = math.powf %26, %27 : vector<24x1xf32>
    %cst_7 = arith.constant 0.615572214 : f32
    %29 = vector.broadcast %cst_7 : f32 to vector<24x1xf32>
    %30 = arith.subf %29, %28 : vector<24x1xf32>
    %cst_8 = arith.constant 1.42857146 : f32
    %31 = vector.broadcast %cst_8 : f32 to vector<24x1xf32>
    %32 = arith.mulf %30, %31 : vector<24x1xf32>
    %33 = arith.mulf %6, %32 : vector<24x1xf32>
    %cst_9 = arith.constant 0.000000e+00 : f32
    %34 = vector.broadcast %cst_9 : f32 to vector<24x1xf32>
    %35 = arith.select %14, %33, %34 : vector<24x1xi1>, vector<24x1xf32>
    %c0_10 = arith.constant 0 : index
    %c0_11 = arith.constant 0 : index
    %36 = vector.load %arg5[%c0_10, %c0_11] : memref<24x1xf32, #tpu.memory_space<vmem>>, vector<24x1xf32>
    %37 = arith.addf %36, %35 : vector<24x1xf32>
    %c0_12 = arith.constant 0 : index
    %c0_13 = arith.constant 0 : index
    %38 = vector.load %arg5[%c0_12, %c0_13] : memref<24x1xf32, #tpu.memory_space<vmem>>, vector<24x1xf32>
    tpu.vector_store %arg5[%c0_12, %c0_13], %37 {strides = array<i32>} : memref<24x1xf32, #tpu.memory_space<vmem>>, vector<24x1xf32>,
    %c0_i32_14 = arith.constant 0 : i32
    %39 = arith.cmpi eq, %arg1, %c0_i32_14 : i32
    %40 = arith.extui %39 : i1 to i32
    %c0_i32_15 = arith.constant 0 : i32
    %41 = arith.cmpi ne, %40, %c0_i32_15 : i32
    scf.if %41 {
      %c0_16 = arith.constant 0 : index
      %c0_17 = arith.constant 0 : index
      %42 = vector.load %arg5[%c0_16, %c0_17] : memref<24x1xf32, #tpu.memory_space<vmem>>, vector<24x1xf32>
      %43 = vector.shape_cast %42 : vector<24x1xf32> to vector<1x24x1xf32>
      %cst_18 = arith.constant dense<0.000000e+00> : vector<1xf32>
      %44 = vector.multi_reduction <add>, %43, %cst_18 [1, 2] : vector<1x24x1xf32> to vector<1xf32>
      %45 = vector.shape_cast %44 : vector<1xf32> to vector<1x1x1xf32>
      %46 = vector.extract %45[0, 0, 0] : f32 from vector<1x1x1xf32>
      %c0_19 = arith.constant 0 : index
      %c0_20 = arith.constant 0 : index
      %47 = memref.load %arg4[%c0_19, %c0_20] : memref<1x1xf32, #tpu.memory_space<smem>>
      memref.store %46, %arg4[%c0_19, %c0_20] : memref<1x1xf32, #tpu.memory_space<smem>>
    } else {
    }
    return
  }
  func.func @transform_0(%arg0: i32, %arg1: i32) -> (i32, i32) {
    %c1_i32 = arith.constant 1 : i32
    %0 = arith.muli %arg0, %c1_i32 : i32
    %1 = arith.addi %0, %arg1 : i32
    %c0_i32 = arith.constant 0 : i32
    %2 = arith.minsi %1, %c0_i32 : i32
    %c0_i32_0 = arith.constant 0 : i32
    %c0_i32_1 = arith.constant 0 : i32
    return %2, %c0_i32_0 : i32, i32
  }
  func.func @transform_1(%arg0: i32, %arg1: i32) -> (i32, i32) {
    %c1_i32 = arith.constant 1 : i32
    %0 = arith.muli %arg0, %c1_i32 : i32
    %1 = arith.addi %0, %arg1 : i32
    %c0_i32 = arith.constant 0 : i32
    %2 = arith.minsi %1, %c0_i32 : i32
    %c0_i32_0 = arith.constant 0 : i32
    %c0_i32_1 = arith.constant 0 : i32
    return %2, %c0_i32_0 : i32, i32
  }
  func.func @transform_2(%arg0: i32, %arg1: i32) -> (i32, i32) {
    %c0_i32 = arith.constant 0 : i32
    %c0_i32_0 = arith.constant 0 : i32
    return %arg0, %c0_i32 : i32, i32
  }
}

</mosaic_0001>

<llo_original>
// kernel: tpu_custom_call.1
$region0: #{tpu_custom_call.1}
  #allocation0 [shape = 'u32[]', space=smem, size = 0x4, offset = 0x4, fixed_abs, tag = 'smem constant byte address 0x4 - core index']
  #allocation1 [shape = 'u32[144,128]{1,0:T(1,128)}', space=vmem, size = 0x12000, scoped, tag = 'internal scratch']
  #allocation2 [shape = 'f32[24,1]{1,0:T(8,128)}', space=vmem, size = 0x3000, scoped, tag = 'scratch operand']
  %s0 = inlined_call_operand.vmem [shape: f32[20,32], index: 0, kind: input, shape index: {}]
  %s1 = inlined_call_operand.vmem [shape: f32[20,2], index: 1, kind: input, shape index: {}]
  %s2 = inlined_call_operand.hbm [shape: f32[1,1], index: 2, kind: output, shape index: {}]
  %s3 = sld [smem:[#allocation0]]
  $region26: #{tpu_custom_call.1} parent=0
    _
  %s5 = ssub.s32 1, %s3
  %s6 = scalar_select 0, %s5, %s3
  $region1: #{tpu_custom_call.1} parent=0
    #allocation3 [shape = 'u8[512]{0}', space=smem, size = 0x200, scoped, tag = 'output window, operand 0, single buffered']
    #allocation4 [shape = 's32[1]{0}', space=sflag, size = 0x4, scoped, tag = 'scoped memory for tpu_custom_call.1']
    %7 = vsyncpa [#allocation4], 0
    // Predicated region
    $region2: #{tpu_custom_call.1} parent=1 // pred_check
      _
    $region3: #{tpu_custom_call.1} parent=1 // pred_check_branch
      %9 = sbr.rel (0) target = $region5
    $region4: #{tpu_custom_call.1} parent=1 // pred_region
      %s10 = sadd.s32 0, 0
      %p11 = scmp.lt.s32.totalorder %s10, 0
      %s12 = scalar_select %p11, %s10, 0
      %s13 = smul.u32 3, %s12
      %p14 = scmp.lt.s32.totalorder %s13, 2
      %s15 = scalar_select %p14, %s13, 2
      %s16 = smul.addr %s15, 8
      %s17 = scalar_lea.vmem %s0, %s16
      %s18 = sadd.s32 0, 0
      %p19 = scmp.lt.s32.totalorder %s18, 0
      %s20 = scalar_select %p19, %s18, 0
      %s21 = smul.u32 3, %s20
    $region5: #{tpu_custom_call.1} parent=1 // pred_fallthru
      _
    // Predicated region
    $region6: #{tpu_custom_call.1} parent=1 // pred_check
      _
    $region7: #{tpu_custom_call.1} parent=1 // pred_check_branch
      %23 = sbr.rel (0) target = $region9
    $region8: #{tpu_custom_call.1} parent=1 // pred_region
      %s24 = sadd.s32 0, 0
      %p25 = scmp.lt.s32.totalorder %s24, 0
      %s26 = scalar_select %p25, %s24, 0
      %s27 = smul.u32 3, %s26
      %p28 = scmp.lt.s32.totalorder %s27, 2
      %s29 = scalar_select %p28, %s27, 2
      %s30 = smul.addr %s29, 8
      %s31 = scalar_lea.vmem %s1, %s30
      %s32 = sadd.s32 0, 0
      %p33 = scmp.lt.s32.totalorder %s32, 0
      %s34 = scalar_select %p33, %s32, 0
      %s35 = smul.u32 3, %s34
    $region9: #{tpu_custom_call.1} parent=1 // pred_fallthru
      _
    %s36 = sadd.s32 0, 0
    %p37 = scmp.lt.s32.totalorder %s36, 0
    %s38 = scalar_select %p37, %s36, 0
    %s39 = smul.u32 3, %s38
    %p40 = scmp.lt.s32.totalorder %s39, 2
    %s41 = scalar_select %p40, %s39, 2
    %s42 = smul.addr %s41, 8
    %s43 = scalar_lea.vmem %s0, %s42
    %s44 = sadd.s32 0, 0
    %p45 = scmp.lt.s32.totalorder %s44, 0
    %s46 = scalar_select %p45, %s44, 0
    %s47 = smul.u32 3, %s46
    %p48 = scmp.lt.s32.totalorder %s47, 2
    %s49 = scalar_select %p48, %s47, 2
    %s50 = smul.addr %s49, 8
    %s51 = scalar_lea.vmem %s1, %s50
    %s52 = sadd.s32 0, 0
    %p53 = scmp.lt.s32.totalorder %s52, 0
    %s54 = scalar_select %p53, %s52, 0
    %s55 = smul.u32 3, %s54
    %p56 = scmp.lt.s32.totalorder %s55, 2
    %s57 = scalar_select %p56, %s55, 2
    %s58 = smul.addr %s57, 8
    %s59 = scalar_lea.vmem %s0, %s58
    %s60 = sadd.s32 0, 0
    %p61 = scmp.lt.s32.totalorder %s60, 0
    %s62 = scalar_select %p61, %s60, 0
    %s63 = smul.u32 3, %s62
    %s64 = sadd.s32 0, 0
    %p65 = scmp.lt.s32.totalorder %s64, 0
    %s66 = scalar_select %p65, %s64, 0
    %s67 = smul.u32 3, %s66
    %p68 = scmp.lt.s32.totalorder %s67, 2
    %s69 = scalar_select %p68, %s67, 2
    %s70 = smul.addr %s69, 8
    %s71 = scalar_lea.vmem %s1, %s70
    %s72 = sadd.s32 0, 0
    %p73 = scmp.lt.s32.totalorder %s72, 0
    %s74 = scalar_select %p73, %s72, 0
    %s75 = smul.u32 3, %s74
    %p76 = scmp.eq.s32.totalorder 0, 0
    // Predicated region
    $region10: #{tpu_custom_call.1} parent=1 // pred_check
      %p77 = pneg %p76
    $region11: #{tpu_custom_call.1} parent=1 // pred_check_branch
      %79 = sbr.rel (%p77) target = $region13
    $region12: #{tpu_custom_call.1} parent=1 // pred_region
      %vm80 = vcmask 7168
      %81 = vst.msk [vmem:[#allocation2] sm:$0xff] %vm80, 0.0
      %82 = vst.msk [vmem:[#allocation2 + $0x8] sm:$0xff] %vm80, 0.0
      %83 = vst.msk [vmem:[#allocation2 + $0x10] sm:$0xff] %vm80, 0.0
    $region13: #{tpu_custom_call.1} parent=1 // pred_fallthru
      _
    %v84 = vld [vmem:[%s59] sm:$0xff]
    %v85 = vld [vmem:[%s59 + $0x8] sm:$0xff]
    %v86 = vld [vmem:[%s59 + $0x10] sm:$0xff]
    %v87 = vld [vmem:[%s71] sm:$0xff]
    %v88 = vld [vmem:[%s71 + $0x8] sm:$0xff]
    %v89 = vld [vmem:[%s71 + $0x10] sm:$0xff]
    %s90 = sadd.s32 0, 0
    %s91 = smul.u32 %s90, 24
    %v92 = vlaneseq
    %v93 = vshrl.u32 %v92, 7
    %v94 = vadd.s32 %v93, 8
    %v95 = vadd.s32 %v93, 16
    %v96 = vstv %s91
    %v97 = vadd.s32 %v96, %v93
    %v98 = vadd.s32 %v96, %v94
    %v99 = vadd.s32 %v96, %v95
    %vm100 = vcmp.lt.s32.totalorder %v97, 20
    %vm101 = vcmp.lt.s32.totalorder %v98, 20
    %vm102 = vcmp.lt.s32.totalorder %v99, 20
    %vm103 = vcmask 261120
    %v104 = vsel %vm103, %v84, -inf
    %105 = vmax.xlane.f32.xlu0 %v104
    %v106 = vpop.xlane.xlu0 %105
    %v107 = vsel %vm103, %v85, -inf
    %108 = vmax.xlane.f32.xlu0 %v107
    %v109 = vpop.xlane.xlu0 %108
    %v110 = vsel %vm103, %v86, -inf
    %111 = vmax.xlane.f32.xlu0 %v110
    %v112 = vpop.xlane.xlu0 %111
    %v113 = vsub.f32 %v84, %v106
    %v114 = vsub.f32 %v85, %v109
    %v115 = vsub.f32 %v86, %v112
    %v116 = vmul.f32 %v113, 1.442695
    %v117 = vpow.pop %v116
    %v118 = vmul.f32 %v114, 1.442695
    %v119 = vpow.pop %v118
    %v120 = vmul.f32 %v115, 1.442695
    %v121 = vpow.pop %v120
    %v122 = vsel %vm103, %v117, 0.0
    %123 = vadd.xlane.f32.xlu0 %v122
    %v124 = vpop.xlane.xlu0 %123
    %v125 = vsel %vm103, %v119, 0.0
    %126 = vadd.xlane.f32.xlu0 %v125
    %v127 = vpop.xlane.xlu0 %126
    %v128 = vsel %vm103, %v121, 0.0
    %129 = vadd.xlane.f32.xlu0 %v128
    %v130 = vpop.xlane.xlu0 %129
    %v131 = vsub.f32 %v87, %v106
    %v132 = vsub.f32 %v88, %v109
    %v133 = vsub.f32 %v89, %v112
    %v134 = vmul.f32 %v131, 1.442695
    %v135 = vpow.pop %v134
    %v136 = vmul.f32 %v132, 1.442695
    %v137 = vpow.pop %v136
    %v138 = vmul.f32 %v133, 1.442695
    %v139 = vpow.pop %v138
    %v140 = vrcp.pop %v124
    %v141 = vmul.f32 %v135, %v140
    %v142 = vrcp.pop %v127
    %v143 = vmul.f32 %v137, %v142
    %v144 = vrcp.pop %v130
    %v145 = vmul.f32 %v139, %v144
    %v146 = vsel %vm100, %v141, 1.0
    %v147 = vsel %vm101, %v143, 1.0
    %v148 = vsel %vm102, %v145, 1.0
    %v149 = vpow.f32 %v146, 0.7
    %v150 = vpow.f32 %v147, 0.7
    %v151 = vpow.f32 %v148, 0.7
    %v152 = vsub.f32 0.6155722, %v149
    %v153 = vsub.f32 0.6155722, %v150
    %v154 = vsub.f32 0.6155722, %v151
    %v155 = vmul.f32 %v152, 1.4285715
    %v156 = vmul.f32 %v153, 1.4285715
    %v157 = vmul.f32 %v154, 1.4285715
    %161 = vrot.lane.b32.xlu0 %v155, 1
    %v162 = vpop.permute.xlu0 %161
    %163 = vrot.lane.b32.xlu0 %v156, 1
    %v164 = vpop.permute.xlu0 %163
    %165 = vrot.lane.b32.xlu0 %v157, 1
    %v166 = vpop.permute.xlu0 %165
    %v170 = vmul.f32 %v87, %v162
    %v171 = vmul.f32 %v88, %v164
    %v172 = vmul.f32 %v89, %v166
    %v173 = vsel %vm100, %v170, 0.0
    %v174 = vsel %vm101, %v171, 0.0
    %v175 = vsel %vm102, %v172, 0.0
    %v176 = vld [vmem:[#allocation2] sm:$0xff]
    %v177 = vld [vmem:[#allocation2 + $0x8] sm:$0xff]
    %v178 = vld [vmem:[#allocation2 + $0x10] sm:$0xff]
    %182 = vrot.lane.b32.xlu0 %v173, 127
    %v183 = vpop.permute.xlu0 %182
    %184 = vrot.lane.b32.xlu0 %v174, 127
    %v185 = vpop.permute.xlu0 %184
    %186 = vrot.lane.b32.xlu0 %v175, 127
    %v187 = vpop.permute.xlu0 %186
    %v191 = vadd.f32 %v176, %v183
    %v192 = vadd.f32 %v177, %v185
    %v193 = vadd.f32 %v178, %v187
    %vm194 = vcmask 7168
    %195 = vst.msk [vmem:[#allocation2] sm:$0xff] %vm194, %v191
    %196 = vst.msk [vmem:[#allocation2 + $0x8] sm:$0xff] %vm194, %v192
    %197 = vst.msk [vmem:[#allocation2 + $0x10] sm:$0xff] %vm194, %v193
    // Predicated region
    $region14: #{tpu_custom_call.1} parent=1 // pred_check
      %p198 = pneg %p76
    $region15: #{tpu_custom_call.1} parent=1 // pred_check_branch
      %200 = sbr.rel (%p198) target = $region17
    $region16: #{tpu_custom_call.1} parent=1 // pred_region
      %v201 = vld [vmem:[#allocation2] sm:$0xff]
      %v202 = vld [vmem:[#allocation2 + $0x8] sm:$0xff]
      %v203 = vld [vmem:[#allocation2 + $0x10] sm:$0xff]
      %v204 = vsel %vm194, %v201, 0.0
      %v205 = vsel %vm194, %v202, 0.0
      %v206 = vadd.f32 %v204, %v205
      %v207 = vsel %vm194, %v203, 0.0
      %v208 = vadd.f32 %v206, %v207
      %209 = vadd.xlane.f32.xlu0 %v208
      %v210 = vpop.xlane.xlu0 %209
      %v211 = vrot.slane %v210, 4
      %v212 = vadd.f32 %v210, %v211
      %v213 = vrot.slane %v212, 2
      %v214 = vadd.f32 %v212, %v213
      %v215 = vrot.slane %v214, 1
      %v216 = vadd.f32 %v214, %v215
      %s217 = vtos %v216
      %s218 = scalar_lea.smem [#allocation3], 0
      %219 = sst [smem:[%s218]] %s217
    $region17: #{tpu_custom_call.1} parent=1 // pred_fallthru
      _
    // Predicated region
    $region18: #{tpu_custom_call.1} parent=1 // pred_check
      _
    $region19: #{tpu_custom_call.1} parent=1 // pred_check_branch
      %221 = sbr.rel (0) target = $region21
    $region20: #{tpu_custom_call.1} parent=1 // pred_region
      %s223 = ssub.s32 16, 16
      %224 = vsyncadd [#allocation4], %s223
      %227 = dma.smem_to_hbm [#allocation3], 16, %s2, [#allocation4]
    $region21: #{tpu_custom_call.1} parent=1 // pred_fallthru
      _
    // Predicated region
    $region22: #{tpu_custom_call.1} parent=1 // pred_check
      _
    $region23: #{tpu_custom_call.1} parent=1 // pred_check_branch
      %229 = sbr.rel (0) target = $region25
    $region24: #{tpu_custom_call.1} parent=1 // pred_region
      %230 = dma.done [#allocation4], 16
    $region25: #{tpu_custom_call.1} parent=1 // pred_fallthru
      _
    %231 = sfence
    %232 = vsyncpa [#allocation4], 1

</llo_original>
